<compile_context>
chip_gen: v7x
topology: tpu7x:2x2x1
jax: 0.10.0
libtpu: 0.0.40
codegen_flags: <defaults>
</compile_context>

<pallas_src>
import functools

import jax
import jax.numpy as jnp
from jax.experimental import pallas as pl
from jax.experimental.pallas import tpu as pltpu


def _focal_kernel(w_ref, x_ref, t_ref, out_ref, *, gamma, ignore_index, hw, tile_p):
    """One (C, tile_p) tile: classes on sublanes, pixels on lanes."""
    pj = pl.program_id(1)

    @pl.when(pj == 0)
    def _():
        out_ref[...] = jnp.zeros_like(out_ref)

    x = x_ref[...].astype(jnp.float32)            # (C, TP) logits tile
    t = t_ref[...]                                # (1, TP) int32 targets
    w = w_ref[...].astype(jnp.float32)            # (C, 1) class weights

    # numerically stable log-softmax over the class (sublane) axis
    m = jnp.max(x, axis=0, keepdims=True)                                # (1, TP)
    lse = m + jnp.log(jnp.sum(jnp.exp(x - m), axis=0, keepdims=True))    # (1, TP)

    # gather target-class logit / weight via a one-hot sublane reduce
    class_ids = jax.lax.broadcasted_iota(jnp.int32, x.shape, 0)          # (C, TP)
    onehot = (class_ids == t).astype(jnp.float32)                        # (C, TP)
    x_t = jnp.sum(x * onehot, axis=0, keepdims=True)                     # (1, TP)
    w_t = jnp.sum(w * onehot, axis=0, keepdims=True)                     # (1, TP)

    valid = t != ignore_index
    if hw % tile_p != 0:
        # mask lanes of the partial trailing tile that fall outside the image
        lane = jax.lax.broadcasted_iota(jnp.int32, t.shape, 1)
        valid = valid & ((pj * tile_p + lane) < hw)

    # weighted cross entropy per pixel; 0 for ignored / out-of-range pixels
    # (matches F.cross_entropy(..., reduction='none', ignore_index=...))
    ce = jnp.where(valid, w_t * (lse - x_t), 0.0)                        # (1, TP)

    f = 1.0 - jnp.exp(-ce)
    if gamma == 2:
        focal = f * f
    elif gamma == 1:
        focal = f
    else:
        focal = f ** gamma

    # pure VPU lane-wise accumulation; cross-lane sum happens once in wrapper
    out_ref[...] += focal * ce


def _adaptive_weights(targets, num_classes, ignore_index, beta, min_weight):
    """Per-class weights from batch class frequencies (plain-JAX glue)."""
    t_flat = targets.reshape(-1)
    valid = t_flat != ignore_index
    safe_t = jnp.where(valid, t_flat, 0).astype(jnp.int32)
    counts = jnp.bincount(safe_t, weights=valid.astype(jnp.float32),
                          length=num_classes)
    total = jnp.sum(counts)
    class_probs = jnp.where(
        total > 0.0,
        counts / jnp.maximum(total, 1.0),
        jnp.full((num_classes,), 1.0 / num_classes, dtype=jnp.float32),
    )
    min_prob = min_weight / num_classes
    class_probs = jnp.maximum(class_probs, min_prob)
    inv_freq = 1.0 / (class_probs + 1e-5)
    norm_weights = inv_freq / jnp.max(inv_freq)
    norm_weights = jnp.maximum(norm_weights, min_weight)
    return beta * norm_weights + (1.0 - beta)


def focal_loss(logits, targets, *, gamma=2.0, ignore_index=255, adaptive=True,
               beta=0.9, min_weight=0.5, weight=None, tile_p=32768):
    """logits: (N, C, H, W) float32/bf16; targets: (N, H, W) int."""
    N, C, H, W = logits.shape
    HW = H * W
    P = N * HW

    if adaptive:
        weights = _adaptive_weights(targets, C, ignore_index, beta, min_weight)
    elif weight is not None:
        weights = jnp.asarray(weight, jnp.float32)
    else:
        weights = jnp.ones((C,), jnp.float32)
    w2d = weights.reshape(C, 1).astype(jnp.float32)

    # Free reshapes of NCHW (no transpose, no extra HBM copy).
    x3 = logits.reshape(N, C, HW)
    t3 = targets.astype(jnp.int32).reshape(N, 1, HW)

    # Lane-dense tile: a multiple of 128 not exceeding HW (or all of HW when
    # HW < 128).  Partial trailing tiles are masked in-kernel, so no padding.
    if HW >= 128:
        tp = min(max(128, (tile_p // 128) * 128), (HW // 128) * 128)
    else:
        tp = HW
    grid = (N, pl.cdiv(HW, tp))

    kernel = functools.partial(_focal_kernel, gamma=gamma,
                               ignore_index=ignore_index, hw=HW, tile_p=tp)

    partials = pl.pallas_call(
        kernel,
        out_shape=jax.ShapeDtypeStruct((N, 1, tp), jnp.float32),
        grid=grid,
        in_specs=[
            pl.BlockSpec((C, 1), lambda n, p: (0, 0)),            # class weights
            pl.BlockSpec((None, C, tp), lambda n, p: (n, 0, p)),  # logits tile
            pl.BlockSpec((None, 1, tp), lambda n, p: (n, 0, p)),  # targets tile
        ],
        out_specs=pl.BlockSpec((None, 1, tp), lambda n, p: (n, 0, 0)),
        compiler_params=pltpu.CompilerParams(
            dimension_semantics=("parallel", "arbitrary")),
    )(w2d, x3, t3)

    # .mean() over all N*H*W pixels (ignored pixels contribute 0 but count in
    # the denominator, matching reduction='none' followed by .mean()).
    return jnp.sum(partials) / P


def _focal_loss_ref(logits, targets, *, gamma=2.0, ignore_index=255,
                    adaptive=True, beta=0.9, min_weight=0.5, weight=None):
    """Pure-JAX reference mirroring the PyTorch forward, for validation."""
    N, C, H, W = logits.shape
    if adaptive:
        weights = _adaptive_weights(targets, C, ignore_index, beta, min_weight)
    elif weight is not None:
        weights = jnp.asarray(weight, jnp.float32)
    else:
        weights = jnp.ones((C,), jnp.float32)
    x = jnp.transpose(logits, (0, 2, 3, 1)).reshape(-1, C).astype(jnp.float32)
    t = targets.reshape(-1)
    logp = jax.nn.log_softmax(x, axis=-1)
    valid = t != ignore_index
    safe_t = jnp.where(valid, t, 0)
    nll = -jnp.take_along_axis(logp, safe_t[:, None], axis=-1)[:, 0]
    ce = jnp.where(valid, weights[safe_t] * nll, 0.0)
    focal = (1.0 - jnp.exp(-ce)) ** gamma
    return jnp.mean(focal * ce)


if __name__ == "__main__":
    key = jax.random.PRNGKey(0)
    k1, k2, k3, k4, k5, k6 = jax.random.split(key, 6)

    # Case 1: "nice" shapes (HW multiple of 128).
    N, C, H, W = 2, 4, 16, 16
    logits = jax.random.normal(k1, (N, C, H, W), dtype=jnp.float32)
    targets = jax.random.randint(k2, (N, H, W), 0, C, dtype=jnp.int32)
    targets = jnp.where(jax.random.uniform(k3, (N, H, W)) < 0.1, 255, targets)
    loss = jax.block_until_ready(focal_loss(logits, targets))
    ref = jax.block_until_ready(_focal_loss_ref(logits, targets))
    assert jnp.allclose(loss, ref, rtol=1e-5, atol=1e-5), (loss, ref)

    # Case 2: ragged shapes (HW not a multiple of 128 -> masked trailing tile).
    N2, C2, H2, W2 = 2, 5, 9, 25
    logits2 = jax.random.normal(k4, (N2, C2, H2, W2), dtype=jnp.float32)
    targets2 = jax.random.randint(k5, (N2, H2, W2), 0, C2, dtype=jnp.int32)
    targets2 = jnp.where(jax.random.uniform(k6, (N2, H2, W2)) < 0.1, 255, targets2)
    loss2 = jax.block_until_ready(focal_loss(logits2, targets2))
    ref2 = jax.block_until_ready(_focal_loss_ref(logits2, targets2))
    assert jnp.allclose(loss2, ref2, rtol=1e-5, atol=1e-5), (loss2, ref2)

    print("KERNEL_OK")
</pallas_src>

<mosaic_0001>
module attributes {stable_mosaic.version = 11 : i64} {
  func.func @_focal_kernel(%arg0: i32, %arg1: i32, %arg2: memref<4x1xf32, #tpu.memory_space<vmem>>, %arg3: memref<1x4x256xf32, #tpu.memory_space<vmem>>, %arg4: memref<1x1x256xi32, #tpu.memory_space<vmem>>, %arg5: memref<1x1x256xf32, #tpu.memory_space<vmem>>) attributes {dimension_semantics = [#tpu.dimension_semantics<parallel>, #tpu.dimension_semantics<arbitrary>], iteration_bounds = array<i64: 2, 1>, scalar_prefetch = 0 : i64, scratch_operands = 0 : i64, tpu.core_type = #tpu.core_type<tc>, window_params = [{pipeline_mode = #tpu.pipeline_mode<synchronous>, transform_indices = @transform_0, window_bounds = array<i64: 4, 1>}, {transform_indices = @transform_1, window_bounds = array<i64: 1, 4, 256>}, {transform_indices = @transform_2, window_bounds = array<i64: 1, 1, 256>}, {transform_indices = @transform_3, window_bounds = array<i64: 1, 1, 256>}]} {
    %c0_i32 = arith.constant 0 : i32
    %0 = arith.cmpi eq, %arg1, %c0_i32 : i32
    %1 = arith.extui %0 : i1 to i32
    %c0_i32_0 = arith.constant 0 : i32
    %2 = arith.cmpi ne, %1, %c0_i32_0 : i32
    scf.if %2 {
      %cst_20 = arith.constant 0.000000e+00 : f32
      %48 = vector.broadcast %cst_20 : f32 to vector<1x256xf32>
      %c0_21 = arith.constant 0 : index
      %c0_22 = arith.constant 0 : index
      %c0_23 = arith.constant 0 : index
      %49 = vector.load %arg5[%c0_21, %c0_22, %c0_23] : memref<1x1x256xf32, #tpu.memory_space<vmem>>, vector<1x1x256xf32>
      %50 = vector.shape_cast %49 : vector<1x1x256xf32> to vector<1x256xf32>
      %51 = vector.shape_cast %48 : vector<1x256xf32> to vector<1x1x256xf32>
      tpu.vector_store %arg5[%c0_21, %c0_22, %c0_23], %51 {strides = array<i32>} : memref<1x1x256xf32, #tpu.memory_space<vmem>>, vector<1x1x256xf32>,
    } else {
    }
    %c0 = arith.constant 0 : index
    %c0_1 = arith.constant 0 : index
    %c0_2 = arith.constant 0 : index
    %3 = vector.load %arg3[%c0, %c0_1, %c0_2] : memref<1x4x256xf32, #tpu.memory_space<vmem>>, vector<1x4x256xf32>
    %4 = vector.shape_cast %3 : vector<1x4x256xf32> to vector<4x256xf32>
    %c0_3 = arith.constant 0 : index
    %c0_4 = arith.constant 0 : index
    %c0_5 = arith.constant 0 : index
    %5 = vector.load %arg4[%c0_3, %c0_4, %c0_5] : memref<1x1x256xi32, #tpu.memory_space<vmem>>, vector<1x1x256xi32>
    %6 = vector.shape_cast %5 : vector<1x1x256xi32> to vector<1x256xi32>
    %c0_6 = arith.constant 0 : index
    %c0_7 = arith.constant 0 : index
    %7 = vector.load %arg2[%c0_6, %c0_7] : memref<4x1xf32, #tpu.memory_space<vmem>>, vector<4x1xf32>
    %cst = arith.constant dense<0xFF800000> : vector<256xf32>
    %8 = vector.multi_reduction <maximumf>, %4, %cst [0] : vector<4x256xf32> to vector<256xf32>
    %9 = vector.shape_cast %8 : vector<256xf32> to vector<1x256xf32>
    %10 = vector.broadcast %9 : vector<1x256xf32> to vector<4x256xf32>
    %11 = arith.subf %4, %10 : vector<4x256xf32>
    %12 = math.exp %11 : vector<4x256xf32>
    %cst_8 = arith.constant dense<0.000000e+00> : vector<256xf32>
    %13 = vector.multi_reduction <add>, %12, %cst_8 [0] : vector<4x256xf32> to vector<256xf32>
    %14 = vector.shape_cast %13 : vector<256xf32> to vector<1x256xf32>
    %15 = math.log %14 : vector<1x256xf32>
    %16 = arith.addf %9, %15 : vector<1x256xf32>
    %17 = tpu.iota {dimensions = array<i32: 0>} : vector<4x256xi32>
    %18 = vector.broadcast %6 : vector<1x256xi32> to vector<4x256xi32>
    %19 = arith.cmpi eq, %17, %18 : vector<4x256xi32>
    %20 = arith.extui %19 : vector<4x256xi1> to vector<4x256xi32>
    %21 = arith.sitofp %20 : vector<4x256xi32> to vector<4x256xf32>
    %22 = arith.mulf %4, %21 : vector<4x256xf32>
    %cst_9 = arith.constant dense<0.000000e+00> : vector<256xf32>
    %23 = vector.multi_reduction <add>, %22, %cst_9 [0] : vector<4x256xf32> to vector<256xf32>
    %24 = vector.shape_cast %23 : vector<256xf32> to vector<1x256xf32>
    %25 = vector.broadcast %7 : vector<4x1xf32> to vector<4x256xf32>
    %26 = arith.mulf %25, %21 : vector<4x256xf32>
    %cst_10 = arith.constant dense<0.000000e+00> : vector<256xf32>
    %27 = vector.multi_reduction <add>, %26, %cst_10 [0] : vector<4x256xf32> to vector<256xf32>
    %28 = vector.shape_cast %27 : vector<256xf32> to vector<1x256xf32>
    %c255_i32 = arith.constant 255 : i32
    %29 = vector.broadcast %c255_i32 : i32 to vector<1x256xi32>
    %30 = arith.cmpi ne, %6, %29 : vector<1x256xi32>
    %31 = arith.subf %16, %24 : vector<1x256xf32>
    %32 = arith.mulf %28, %31 : vector<1x256xf32>
    %cst_11 = arith.constant 0.000000e+00 : f32
    %33 = vector.broadcast %cst_11 : f32 to vector<1x256xf32>
    %34 = arith.select %30, %32, %33 : vector<1x256xi1>, vector<1x256xf32>
    %cst_12 = arith.constant 0.000000e+00 : f32
    %35 = vector.broadcast %cst_12 : f32 to vector<1x256xf32>
    %36 = arith.subf %35, %34 : vector<1x256xf32>
    %37 = math.exp %36 : vector<1x256xf32>
    %cst_13 = arith.constant 1.000000e+00 : f32
    %38 = vector.broadcast %cst_13 : f32 to vector<1x256xf32>
    %39 = arith.subf %38, %37 : vector<1x256xf32>
    %40 = arith.mulf %39, %39 : vector<1x256xf32>
    %c0_14 = arith.constant 0 : index
    %c0_15 = arith.constant 0 : index
    %c0_16 = arith.constant 0 : index
    %41 = vector.load %arg5[%c0_14, %c0_15, %c0_16] : memref<1x1x256xf32, #tpu.memory_space<vmem>>, vector<1x1x256xf32>
    %42 = vector.shape_cast %41 : vector<1x1x256xf32> to vector<1x256xf32>
    %43 = arith.mulf %40, %34 : vector<1x256xf32>
    %44 = arith.addf %42, %43 : vector<1x256xf32>
    %c0_17 = arith.constant 0 : index
    %c0_18 = arith.constant 0 : index
    %c0_19 = arith.constant 0 : index
    %45 = vector.load %arg5[%c0_17, %c0_18, %c0_19] : memref<1x1x256xf32, #tpu.memory_space<vmem>>, vector<1x1x256xf32>
    %46 = vector.shape_cast %45 : vector<1x1x256xf32> to vector<1x256xf32>
    %47 = vector.shape_cast %44 : vector<1x256xf32> to vector<1x1x256xf32>
    tpu.vector_store %arg5[%c0_17, %c0_18, %c0_19], %47 {strides = array<i32>} : memref<1x1x256xf32, #tpu.memory_space<vmem>>, vector<1x1x256xf32>,
    return
  }
  func.func @transform_0(%arg0: i32, %arg1: i32) -> (i32, i32) {
    %c0_i32 = arith.constant 0 : i32
    %c0_i32_0 = arith.constant 0 : i32
    %c0_i32_1 = arith.constant 0 : i32
    return %c0_i32, %c0_i32_0 : i32, i32
  }
  func.func @transform_1(%arg0: i32, %arg1: i32) -> (i32, i32, i32) {
    %c0_i32 = arith.constant 0 : i32
    %c0_i32_0 = arith.constant 0 : i32
    return %arg0, %c0_i32, %arg1 : i32, i32, i32
  }
  func.func @transform_2(%arg0: i32, %arg1: i32) -> (i32, i32, i32) {
    %c0_i32 = arith.constant 0 : i32
    %c0_i32_0 = arith.constant 0 : i32
    return %arg0, %c0_i32, %arg1 : i32, i32, i32
  }
  func.func @transform_3(%arg0: i32, %arg1: i32) -> (i32, i32, i32) {
    %c0_i32 = arith.constant 0 : i32
    %c0_i32_0 = arith.constant 0 : i32
    %c0_i32_1 = arith.constant 0 : i32
    return %arg0, %c0_i32, %c0_i32_0 : i32, i32, i32
  }
}

</mosaic_0001>

<llo_original>
// kernel: tpu_custom_call.1
$region0: #{tpu_custom_call.1}
  #allocation0 [shape = 'u32[]', space=smem, size = 0x4, offset = 0x4, fixed_abs, tag = 'smem constant byte address 0x4 - core index']
  #allocation1 [shape = 'u32[144,128]{1,0:T(1,128)}', space=vmem, size = 0x12000, scoped, tag = 'internal scratch']
  %s0 = inlined_call_operand.vmem [shape: f32[4,1], index: 0, kind: input, shape index: {}]
  %s1 = inlined_call_operand.hbm [shape: f32[2,4,256], index: 1, kind: input, shape index: {}]
  %s2 = inlined_call_operand.vmem [shape: s32[2,1,256], index: 2, kind: input, shape index: {}]
  %s3 = inlined_call_operand.hbm [shape: f32[2,1,256], index: 3, kind: output, shape index: {}]
  %s4 = sld [smem:[#allocation0]]
  $region53: #{tpu_custom_call.1} parent=0
    _
  %s6 = ssub.s32 1, %s4
  %s7 = scalar_select 0, %s6, %s4
  $region1: #{tpu_custom_call.1} parent=0
    #allocation2 [shape = 'u8[8192]{0}', space=vmem, size = 0x2000, scoped, tag = 'input window, operand 1']
    #allocation3 [shape = 's32[2]{0}', space=sflag, size = 0x8, scoped, tag = 'scoped memory for tpu_custom_call.1']
    #allocation4 [shape = 's32[2]{0}', space=sflag, size = 0x8, scoped, tag = 'scoped memory for tpu_custom_call.1']
    #allocation5 [shape = 'u8[2048]{0}', space=vmem, size = 0x800, scoped, tag = 'output window, operand 0']
    %8 = vsyncpa [#allocation3], 0
    %s9 = scalar_lea.sflag [#allocation3], 1
    %10 = vsyncpa %s9, 0
    %11 = vsyncpa [#allocation4], 0
    %s12 = scalar_lea.sflag [#allocation4], 1
    %13 = vsyncpa %s12, 0
    loop: start=0, step=1, limit=4
    $region2: #{tpu_custom_call.1} parent=1 // loop_pre_header
      _
    $region3: #{tpu_custom_call.1} parent=1 // loop_header
      %s15 = sphi 0, %s19
      %p16 = scmp.ge.s32.totalorder %s15, 4
      %s22 = sphi 0, %s34
      %s23 = sphi 0, %s30
      %s24 = sphi 0, %s22
      %s25 = sphi 0, %s23
      %s26 = sphi 0, %s24
      %s27 = sphi 0, %s25
      %s35 = sphi 0, %s35
      %s37 = sphi 0, %s35
      %s38 = sphi 0, %s37
      %s52 = sphi 0, %s38
      %s60 = sphi 0, %s62
      %s63 = sphi 0, %s60
      %s64 = sphi 0, %s63
      %s80 = sphi 0, %s64
      %s88 = sphi 0, %s90
      %s91 = sphi 0, %s88
      %s92 = sphi 0, %s91
      %s108 = sphi 0, %s92
      %s114 = sphi 0, %s116
      %s117 = sphi 0, %s114
      %s118 = sphi 0, %s117
      %s134 = sphi 0, %s118
    $region4: #{tpu_custom_call.1} parent=1 // loop_header_branch
      %18 = sbr.rel (%p16) target = $region8
    $region5: #{tpu_custom_call.1} parent=1 // loop_body
      %s20 = ssub.s32 %s15, 1
      %s21 = ssub.s32 %s15, 2
      %s28 = sadd.s32 1, %s23
      %p29 = scmp.ge.s32.totalorder %s28, 1
      %s30 = scalar_select %p29, 0, %s28
      %s31 = sadd.s32 1, %s22
      %s32 = scalar_select %p29, %s31, %s22
      %p33 = scmp.ge.s32.totalorder %s32, 2
      %s34 = scalar_select %p33, 0, %s32
      %s36 = sadd.s32 %s35, 1
      %p39 = scmp.eq.s32.totalorder %s15, 1
      %p40 = scmp.ne.s32.totalorder %s35, %s37
      %p41 = scmp.eq.s32.totalorder %s15, 0
      %p42 = por %p40, %p41
      %p43 = scmp.ne.s32.totalorder %s35, %s37
      %p44 = scmp.eq.s32.totalorder %s20, 1
      %p45 = por %p43, %p44
      %p46 = scmp.ne.s32.totalorder %s37, %s38
      %p47 = scmp.eq.s32.totalorder %s20, 0
      %p48 = por %p46, %p47
      %p49 = scmp.ne.s32.totalorder %s37, %s38
      %p50 = scmp.eq.s32.totalorder %s21, 1
      %p51 = por %p49, %p50
      %p53 = scmp.ne.s32.totalorder %s38, %s52
      %p54 = scmp.eq.s32.totalorder %s21, 0
      %p55 = por %p53, %p54
      %s56 = ssub.s32 %s22, %s34
      %s57 = ssub.s32 %s23, %s30
      %s58 = sor.u32 %s56, %s57
      %p59 = scmp.eq.s32.totalorder %s58, 0
      %s61 = sadd.s32 %s60, 1
      %s62 = scalar_select %p59, %s60, %s61
      %p65 = pneg %p59
      %p66 = scmp.eq.s32.totalorder %s15, 1
      %p67 = por %p65, %p66
      %p68 = scmp.ne.s32.totalorder %s60, %s63
      %p69 = scmp.eq.s32.totalorder %s15, 0
      %p70 = por %p68, %p69
      %p71 = scmp.ne.s32.totalorder %s60, %s63
      %p72 = scmp.eq.s32.totalorder %s20, 1
      %p73 = por %p71, %p72
      %p74 = scmp.ne.s32.totalorder %s63, %s64
      %p75 = scmp.eq.s32.totalorder %s20, 0
      %p76 = por %p74, %p75
      %p77 = scmp.ne.s32.totalorder %s63, %s64
      %p78 = scmp.eq.s32.totalorder %s21, 1
      %p79 = por %p77, %p78
      %p81 = scmp.ne.s32.totalorder %s64, %s80
      %p82 = scmp.eq.s32.totalorder %s21, 0
      %p83 = por %p81, %p82
      %s84 = ssub.s32 %s22, %s34
      %s85 = ssub.s32 %s23, %s30
      %s86 = sor.u32 %s84, %s85
      %p87 = scmp.eq.s32.totalorder %s86, 0
      %s89 = sadd.s32 %s88, 1
      %s90 = scalar_select %p87, %s88, %s89
      %p93 = pneg %p87
      %p94 = scmp.eq.s32.totalorder %s15, 1
      %p95 = por %p93, %p94
      %p96 = scmp.ne.s32.totalorder %s88, %s91
      %p97 = scmp.eq.s32.totalorder %s15, 0
      %p98 = por %p96, %p97
      %p99 = scmp.ne.s32.totalorder %s88, %s91
      %p100 = scmp.eq.s32.totalorder %s20, 1
      %p101 = por %p99, %p100
      %p102 = scmp.ne.s32.totalorder %s91, %s92
      %p103 = scmp.eq.s32.totalorder %s20, 0
      %p104 = por %p102, %p103
      %p105 = scmp.ne.s32.totalorder %s91, %s92
      %p106 = scmp.eq.s32.totalorder %s21, 1
      %p107 = por %p105, %p106
      %p109 = scmp.ne.s32.totalorder %s92, %s108
      %p110 = scmp.eq.s32.totalorder %s21, 0
      %p111 = por %p109, %p110
      %s112 = ssub.s32 %s22, %s34
      %p113 = scmp.eq.s32.totalorder %s112, 0
      %s115 = sadd.s32 %s114, 1
      %s116 = scalar_select %p113, %s114, %s115
      %p119 = pneg %p113
      %p120 = scmp.eq.s32.totalorder %s15, 1
      %p121 = por %p119, %p120
      %p122 = scmp.ne.s32.totalorder %s114, %s117
      %p123 = scmp.eq.s32.totalorder %s15, 0
      %p124 = por %p122, %p123
      %p125 = scmp.ne.s32.totalorder %s114, %s117
      %p126 = scmp.eq.s32.totalorder %s20, 1
      %p127 = por %p125, %p126
      %p128 = scmp.ne.s32.totalorder %s117, %s118
      %p129 = scmp.eq.s32.totalorder %s20, 0
      %p130 = por %p128, %p129
      %p131 = scmp.ne.s32.totalorder %s117, %s118
      %p132 = scmp.eq.s32.totalorder %s21, 1
      %p133 = por %p131, %p132
      %p135 = scmp.ne.s32.totalorder %s118, %s134
      %p136 = scmp.eq.s32.totalorder %s21, 0
      %p137 = por %p135, %p136
      %p138 = scmp.le.s32.totalorder 1, %s15
      %p139 = scmp.lt.s32.totalorder %s15, 3
      %p140 = pnand %p138, %p139
      %p141 = pneg %p140
      // Predicated region
      $region9: #{tpu_custom_call.1} parent=5 // pred_check
        _
      $region10: #{tpu_custom_call.1} parent=5 // pred_check_branch
        %143 = sbr.rel (%p140) target = $region12
      $region11: #{tpu_custom_call.1} parent=5 // pred_region
        %s144 = ssub.s32 %s15, 1
        // Predicated region
        $region13: #{tpu_custom_call.1} parent=11 // pred_check
          %p145 = pneg %p48
        $region14: #{tpu_custom_call.1} parent=11 // pred_check_branch
          %147 = sbr.rel (%p145) target = $region16
        $region15: #{tpu_custom_call.1} parent=11 // pred_region
          _
        $region16: #{tpu_custom_call.1} parent=11 // pred_fallthru
          _
      $region12: #{tpu_custom_call.1} parent=5 // pred_fallthru
        _
      %p148 = scmp.lt.s32.totalorder %s15, 2
      // Predicated region
      $region17: #{tpu_custom_call.1} parent=5 // pred_check
        %p149 = pneg %p148
      $region18: #{tpu_custom_call.1} parent=5 // pred_check_branch
        %151 = sbr.rel (%p149) target = $region20
      $region19: #{tpu_custom_call.1} parent=5 // pred_region
        // Predicated region
        $region21: #{tpu_custom_call.1} parent=19 // pred_check
          %p152 = pneg %p70
        $region22: #{tpu_custom_call.1} parent=19 // pred_check_branch
          %154 = sbr.rel (%p152) target = $region24
        $region23: #{tpu_custom_call.1} parent=19 // pred_region
          %s155 = sand.u32 %s60, 1
          %s156 = scalar_lea.sflag [#allocation3], %s155
          %s157 = sand.u32 %s60, 1
          %s158 = smul.addr %s157, 8
          %s159 = scalar_lea.vmem [#allocation2], %s158
          %s160 = smul.u32 2, %s23
          %s162 = ssub.s32 128, 128
          %163 = vsyncadd %s156, %s162
          %s164 = smul.addr %s22, 2
          %s165 = sadd.s32 %s160, %s164
          %s166 = smul.addr %s165, 64
          %s167 = scalar_lea.hbm %s1, %s166
          %s169 = sshll.u32 %s159, 4
          %s170 = int_to_ptr.vmem [resolvable:$true] %s169
          %172 = dma.hbm_to_vmem [thread:$0]  %s167, 128, %s170, %s156
        $region24: #{tpu_custom_call.1} parent=19 // pred_fallthru
          _
        // Predicated region
        $region25: #{tpu_custom_call.1} parent=19 // pred_check
          %p173 = pneg %p98
        $region26: #{tpu_custom_call.1} parent=19 // pred_check_branch
          %175 = sbr.rel (%p173) target = $region28
        $region27: #{tpu_custom_call.1} parent=19 // pred_region
          %s176 = smul.u32 2, %s23
          %p177 = scmp.lt.s32.totalorder %s22, 1
          %s178 = scalar_select %p177, %s22, 1
          %p179 = scmp.lt.s32.totalorder %s176, 1
          %s180 = scalar_select %p179, %s176, 1
          %s181 = smul.addr %s178, 2
          %s182 = sadd.s32 %s180, %s181
          %s183 = scalar_lea.vmem %s2, %s182
          %s184 = smul.u32 2, %s23
        $region28: #{tpu_custom_call.1} parent=19 // pred_fallthru
          _
      $region20: #{tpu_custom_call.1} parent=5 // pred_fallthru
        _
      %p185 = scmp.le.s32.totalorder 1, %s15
      %p186 = scmp.lt.s32.totalorder %s15, 3
      %p187 = pnand %p185, %p186
      %p188 = pneg %p187
      // Predicated region
      $region29: #{tpu_custom_call.1} parent=5 // pred_check
        _
      $region30: #{tpu_custom_call.1} parent=5 // pred_check_branch
        %190 = sbr.rel (%p187) target = $region32
      $region31: #{tpu_custom_call.1} parent=5 // pred_region
        %s191 = ssub.s32 %s15, 1
        %s192 = sand.u32 %s63, 1
        %s193 = scalar_lea.sflag [#allocation3], %s192
        %s194 = sand.u32 %s63, 1
        %s195 = smul.addr %s194, 8
        %s196 = scalar_lea.vmem [#allocation2], %s195
        // Predicated region
        $region33: #{tpu_custom_call.1} parent=31 // pred_check
          %p197 = pneg %p76
        $region34: #{tpu_custom_call.1} parent=31 // pred_check_branch
          %199 = sbr.rel (%p197) target = $region36
        $region35: #{tpu_custom_call.1} parent=31 // pred_region
          %200 = dma.done %s193, 128
        $region36: #{tpu_custom_call.1} parent=31 // pred_fallthru
          _
        %p201 = pneg %p48
        %p202 = pneg %p45
        %s203 = sand.u32 %s63, 1
        %s204 = scalar_lea.sflag [#allocation3], %s203
        %s205 = sand.u32 %s63, 1
        %s206 = smul.addr %s205, 8
        %s207 = scalar_lea.vmem [#allocation2], %s206
        %p208 = pneg %p76
        %p209 = pneg %p73
        %s210 = smul.u32 2, %s25
        %p211 = scmp.lt.s32.totalorder %s24, 1
        %s212 = scalar_select %p211, %s24, 1
        %p213 = scmp.lt.s32.totalorder %s210, 1
        %s214 = scalar_select %p213, %s210, 1
        %s215 = smul.addr %s212, 2
        %s216 = sadd.s32 %s214, %s215
        %s217 = scalar_lea.vmem %s2, %s216
        %p218 = pneg %p104
        %p219 = pneg %p101
        %p220 = pneg %p130
        %p221 = pneg %p127
        %s222 = sand.u32 %s117, 1
        %s223 = scalar_lea.sflag [#allocation4], %s222
        %s224 = sand.u32 %s117, 1
        %s225 = smul.addr %s224, 2
        %s226 = scalar_lea.vmem [#allocation5], %s225
        %s227 = smul.u32 2, %s25
        %s228 = smul.u32 2, %s25
        %p229 = scmp.lt.s32.totalorder %s24, 1
        %s230 = scalar_select %p229, %s24, 1
        %p231 = scmp.lt.s32.totalorder %s228, 1
        %s232 = scalar_select %p231, %s228, 1
        %s233 = smul.addr %s230, 2
        %s234 = sadd.s32 %s232, %s233
        %s235 = scalar_lea.vmem %s2, %s234
        %s236 = smul.u32 2, %s25
        %p237 = scmp.eq.s32.totalorder %s25, 0
        // Predicated region
        $region37: #{tpu_custom_call.1} parent=31 // pred_check
          %p238 = pneg %p237
        $region38: #{tpu_custom_call.1} parent=31 // pred_check_branch
          %240 = sbr.rel (%p238) target = $region40
        $region39: #{tpu_custom_call.1} parent=31 // pred_region
          %v241 = vlaneseq
          %vm242 = vcmp.ge.s32.totalorder %v241, 0
          %vm243 = vcmp.lt.s32.totalorder %v241, 256
          %vm244 = vmand %vm242, %vm243
          %245 = vst.msk [vmem:[%s226] sm:$0x3] %vm244, 0.0
        $region40: #{tpu_custom_call.1} parent=31 // pred_fallthru
          _
        %v246 = vld [vmem:[%s196] sm:$0xff]
        %v247 = vld [vmem:[%s235] sm:$0x3]
        %v248 = vld [vmem:[%s0] sm:$0xf]
        %v250 = vcombine.high %v246, %v246
        %vm252 = vcmask 1043456
        %v253 = vsel %vm252, %v246, -inf
        %v254 = vrot.slane %v253, 4
        %v255 = vmax.f32 %v253, %v254
        %v256 = vrot.slane %v255, 2
        %v257 = vmax.f32 %v255, %v256
        %v258 = vrot.slane %v257, 1
        %v259 = vmax.f32 %v257, %v258
        %v260 = vsel %vm252, %v250, -inf
        %v261 = vrot.slane %v260, 4
        %v262 = vmax.f32 %v260, %v261
        %v263 = vrot.slane %v262, 2
        %v264 = vmax.f32 %v262, %v263
        %v265 = vrot.slane %v264, 1
        %v266 = vmax.f32 %v264, %v265
        %v269 = vcombine.low %v259, %v266
        %v271 = vsub.f32 %v246, %v269
        %v272 = vmul.f32 %v271, 1.442695
        %v273 = vpow.pop %v272
        %v275 = vcombine.high %v273, %v273
        %v277 = vsel %vm252, %v273, 0.0
        %v278 = vrot.slane %v277, 4
        %v279 = vadd.f32 %v277, %v278
        %v280 = vrot.slane %v279, 2
        %v281 = vadd.f32 %v279, %v280
        %v282 = vrot.slane %v281, 1
        %v283 = vadd.f32 %v281, %v282
        %v284 = vsel %vm252, %v275, 0.0
        %v285 = vrot.slane %v284, 4
        %v286 = vadd.f32 %v284, %v285
        %v287 = vrot.slane %v286, 2
        %v288 = vadd.f32 %v286, %v287
        %v289 = vrot.slane %v288, 1
        %v290 = vadd.f32 %v288, %v289
        %v291 = vlog2.pop %v283
        %v292 = vmul.f32 %v291, 0.6931472
        %v293 = vlog2.pop %v290
        %v294 = vmul.f32 %v293, 0.6931472
        %v295 = vadd.f32 %v259, %v292
        %v296 = vadd.f32 %v266, %v294
        %v297 = vlaneseq
        %v298 = vshrl.u32 %v297, 7
        %v299 = vlaneseq
        %v300 = vshrl.u32 %v299, 7
        %v301 = vsub.s32 0, %v300
        %v302 = vrot.slane %v247, %v301
        %v303 = vlaneseq
        %v304 = vshrl.u32 %v303, 7
        %v305 = vsub.s32 1, %v304
        %v306 = vrot.slane %v247, %v305
        %vm307 = vcmp.eq.s32.totalorder %v298, %v302
        %vm308 = vcmp.eq.s32.totalorder %v298, %v306
        %v309 = vsel %vm307, 1, 0
        %v310 = vsel %vm308, 1, 0
        %v311 = vcvt.s32.f32 %v309
        %v312 = vcvt.s32.f32 %v310
        %v315 = vcombine.low %v311, %v312
        %v317 = vmul.f32 %v246, %v315
        %v319 = vcombine.high %v317, %v317
        %v321 = vsel %vm252, %v317, 0.0
        %v322 = vrot.slane %v321, 4
        %v323 = vadd.f32 %v321, %v322
        %v324 = vrot.slane %v323, 2
        %v325 = vadd.f32 %v323, %v324
        %v326 = vrot.slane %v325, 1
        %v327 = vadd.f32 %v325, %v326
        %v328 = vsel %vm252, %v319, 0.0
        %v329 = vrot.slane %v328, 4
        %v330 = vadd.f32 %v328, %v329
        %v331 = vrot.slane %v330, 2
        %v332 = vadd.f32 %v330, %v331
        %v333 = vrot.slane %v332, 1
        %v334 = vadd.f32 %v332, %v333
        %336 = vset.pattern.permute.xlu0 0
        %337 = vperm.xlu0 %336, %v248
        %v338 = vpop.permute.xlu0 %337
        %v340 = vmul.f32 %v338, %v311
        %v341 = vmul.f32 %v338, %v312
        %v342 = vsel %vm252, %v340, 0.0
        %v343 = vrot.slane %v342, 4
        %v344 = vadd.f32 %v342, %v343
        %v345 = vrot.slane %v344, 2
        %v346 = vadd.f32 %v344, %v345
        %v347 = vrot.slane %v346, 1
        %v348 = vadd.f32 %v346, %v347
        %v349 = vsel %vm252, %v341, 0.0
        %v350 = vrot.slane %v349, 4
        %v351 = vadd.f32 %v349, %v350
        %v352 = vrot.slane %v351, 2
        %v353 = vadd.f32 %v351, %v352
        %v354 = vrot.slane %v353, 1
        %v355 = vadd.f32 %v353, %v354
        %vm356 = vcmp.ne.s32.totalorder %v247, 255
        %v357 = vsub.f32 %v295, %v327
        %v358 = vsub.f32 %v296, %v334
        %v359 = vmul.f32 %v348, %v357
        %v360 = vmul.f32 %v355, %v358
        %v363 = vcombine.low %v359, %v360
        %v365 = vunpack.c.l.s4 1966171168
        %v366 = vunpack.c.0.s8 %v365
        %v367 = vlaneseq
        %v368 = vshrl.u32 %v367, 7
        %v369 = vsub.s32 %v366, %v368
        %v370 = vrot.slane %v363, %v369
        %v372 = vunpack.c.l.s4 1966171168
        %v373 = vunpack.c.0.s8 %v372
        %v374 = vlaneseq
        %v375 = vshrl.u32 %v374, 7
        %v376 = vsub.s32 %v373, %v375
        %v377 = vrot.slane %v370, %v376
        %v379 = vsel %vm356, %v377, 0.0
        %v380 = vsub.f32 0.0, %v379
        %v381 = vmul.f32 %v380, 1.442695
        %v382 = vpow.pop %v381
        %v383 = vsub.f32 1.0, %v382
        %v384 = vmul.f32 %v383, %v383
        %v385 = vld [vmem:[%s226] sm:$0x3]
        %v386 = vmul.f32 %v384, %v379
        %v387 = vadd.f32 %v385, %v386
        %v388 = vlaneseq
        %vm389 = vcmp.ge.s32.totalorder %v388, 0
        %vm390 = vcmp.lt.s32.totalorder %v388, 256
        %vm391 = vmand %vm389, %vm390
        %392 = vst.msk [vmem:[%s226] sm:$0x3] %vm391, %v387
        %s393 = sand.u32 %s117, 1
        %s394 = scalar_lea.sflag [#allocation4], %s393
        %s395 = sand.u32 %s117, 1
        %s396 = smul.addr %s395, 2
        %s397 = scalar_lea.vmem [#allocation5], %s396
        // Predicated region
        $region41: #{tpu_custom_call.1} parent=31 // pred_check
          %p398 = pneg %p127
        $region42: #{tpu_custom_call.1} parent=31 // pred_check_branch
          %400 = sbr.rel (%p398) target = $region44
        $region43: #{tpu_custom_call.1} parent=31 // pred_region
          %s402 = ssub.s32 32, 32
          %403 = vsyncadd %s394, %s402
          %s404 = smul.addr %s24, 2
          %s405 = smul.addr %s404, 16
          %s406 = scalar_lea.hbm %s3, %s405
          %s408 = sshll.u32 %s397, 4
          %s409 = int_to_ptr.vmem [resolvable:$true] %s408
          %411 = dma.vmem_to_hbm [thread:$0]  %s409, 32, %s406, %s394
        $region44: #{tpu_custom_call.1} parent=31 // pred_fallthru
          _
      $region32: #{tpu_custom_call.1} parent=5 // pred_fallthru
        _
      %p412 = scmp.le.s32.totalorder 2, %s15
      // Predicated region
      $region45: #{tpu_custom_call.1} parent=5 // pred_check
        %p413 = pneg %p412
      $region46: #{tpu_custom_call.1} parent=5 // pred_check_branch
        %415 = sbr.rel (%p413) target = $region48
      $region47: #{tpu_custom_call.1} parent=5 // pred_region
        %s416 = ssub.s32 %s15, 2
        // Predicated region
        $region49: #{tpu_custom_call.1} parent=47 // pred_check
          %p417 = pneg %p133
        $region50: #{tpu_custom_call.1} parent=47 // pred_check_branch
          %419 = sbr.rel (%p417) target = $region52
        $region51: #{tpu_custom_call.1} parent=47 // pred_region
          %s420 = sand.u32 %s118, 1
          %s421 = scalar_lea.sflag [#allocation4], %s420
          %s422 = sand.u32 %s118, 1
          %s423 = smul.addr %s422, 2
          %s424 = scalar_lea.vmem [#allocation5], %s423
          %425 = dma.done %s421, 32
        $region52: #{tpu_custom_call.1} parent=47 // pred_fallthru
          _
      $region48: #{tpu_custom_call.1} parent=5 // pred_fallthru
        _
    $region6: #{tpu_custom_call.1} parent=1 // loop_footer
      %s19 = sadd.s32 1, %s15
    $region7: #{tpu_custom_call.1} parent=1 // loop_footer_branch
      %14 = sbr.rel target = $region3
    $region8: #{tpu_custom_call.1} parent=1 // loop_exit
      _
    %426 = vsyncpa [#allocation3], 1
    %s427 = scalar_lea.sflag [#allocation3], 1
    %428 = vsyncpa %s427, 1
    %429 = vsyncpa [#allocation4], 1
    %s430 = scalar_lea.sflag [#allocation4], 1
    %431 = vsyncpa %s430, 1

</llo_original>
